<compile_context>
chip_gen: v7x
topology: tpu7x:2x2x1
jax: 0.10.0
libtpu: 0.0.40
codegen_flags: <defaults>
</compile_context>

<pallas_src>
import math

import jax
import jax.numpy as jnp
from jax.experimental import pallas as pl
from jax.experimental.pallas import tpu as pltpu

_MiB = 1024 * 1024
_BLOCK_BUDGET_BYTES = 8 * _MiB      # target bytes per (tb, tn) activation block
_HARD_BLOCK_CAP_BYTES = 16 * _MiB   # never emit a single block bigger than this
_VMEM_LIMIT_BYTES = 48 * _MiB       # pipeline VMEM budget (safe on v5e/v6e/v7x)
_MIN_SPLIT_BYTES = 4 * _MiB         # only force a >=2-block grid above this size


def _divisor_tile(total, align, cap):
    """Largest multiple of `align` that divides `total` and is <= cap.

    Falls back to the full extent when `total` is not `align`-aligned (allowed by the
    (8,128) rule since a block dim may equal the full array dim); callers byte-guard it."""
    if total % align != 0:
        return total
    if total <= cap:
        return total
    t = (cap // align) * align
    while t >= align:
        if total % t == 0:
            return t
        t -= align
    return align


def _select_tiles(B, N, itemsize):
    """Byte-budget tiles: grow the lane axis first (tn = N when it fits the budget),
    then the sublane axis, keeping each block around _BLOCK_BUDGET_BYTES."""
    sub_align = {1: 32, 2: 16}.get(itemsize, 8)   # dtype-aware sublane alignment

    tb_min = sub_align if B % sub_align == 0 else B
    lane_cap = max(128, _BLOCK_BUDGET_BYTES // (tb_min * itemsize))
    tn = _divisor_tile(N, 128, lane_cap)

    row_cap = max(tb_min, _BLOCK_BUDGET_BYTES // (tn * itemsize))
    tb = _divisor_tile(B, sub_align, min(B, row_cap))

    # Keep >= 2 blocks along one "parallel" axis so v7x's two TensorCores both get
    # work -- but only when there's enough data to be worth splitting.
    if (B // tb) * (N // tn) == 1 and B * N * itemsize >= _MIN_SPLIT_BYTES:
        if B % sub_align == 0 and B // sub_align >= 2:
            tb = _divisor_tile(B, sub_align, max(sub_align, tb // 2))
        elif N % 128 == 0 and N // 128 >= 2:
            tn = _divisor_tile(N, 128, max(128, tn // 2))

    return tb, tn


def _make_kernel(tb, whole_batch_block):
    def kernel(x_ref, s_ref, o_ref):
        # s_ref holds the full (B, 1) f32 scale column, untiled in VMEM.
        if whole_batch_block:
            s = s_ref[...]
        else:
            row0 = pl.multiple_of(pl.program_id(0) * tb, tb)
            s = s_ref[pl.ds(row0, tb), :]
        # Pure VPU broadcast-multiply; lane axis is the flattened C*H*W row.
        o_ref[...] = (x_ref[...] * s).astype(o_ref.dtype)
    return kernel


def dropsample(x, *, prob=0.0, training=False, key=None, donate=False):
    """Forward pass of Dropsample.  x: (B, C, H, W) (any trailing shape works)."""
    if prob == 0.0 or not training:
        return x                                  # identity path, exactly as the module

    if key is None:
        raise ValueError("training Dropsample needs a PRNG key")
    if not (0.0 < prob < 1.0):
        # prob == 1.0 would produce 0/0 = NaN in the PyTorch module as well.
        raise ValueError(f"prob must be in [0, 1), got {prob}")

    B = x.shape[0]
    N = math.prod(x.shape[1:])                    # flatten each sample -> one lane-dense row
    itemsize = jnp.dtype(x.dtype).itemsize

    # B random draws (B floats) outside the kernel; scale kept in f32 for parity.
    keep = jax.random.uniform(key, (B,)) > prob
    scale = (keep.astype(jnp.float32) / jnp.float32(1.0 - prob)).reshape(B, 1)

    x2d = x.reshape(B, N)
    tb, tn = _select_tiles(B, N, itemsize)

    if tb * tn * itemsize > _HARD_BLOCK_CAP_BYTES:
        # TODO(synk): pathological shape (huge row not a multiple of 128) -- pad N up to a
        # lane multiple and tile it instead of falling back to XLA's fused elementwise.
        return (x2d * scale).astype(x.dtype).reshape(x.shape)

    grid = (B // tb, N // tn)
    kernel = _make_kernel(tb, whole_batch_block=(tb == B))

    out2d = pl.pallas_call(
        kernel,
        out_shape=jax.ShapeDtypeStruct((B, N), x.dtype),
        grid=grid,
        in_specs=[
            pl.BlockSpec((tb, tn), lambda i, j: (i, j)),
            pl.BlockSpec(memory_space=pltpu.MemorySpace.VMEM),   # full (B,1) scale, untiled
        ],
        out_specs=pl.BlockSpec((tb, tn), lambda i, j: (i, j)),
        compiler_params=pltpu.CompilerParams(
            dimension_semantics=("parallel", "parallel"),
            vmem_limit_bytes=_VMEM_LIMIT_BYTES),
        input_output_aliases=({0: 0} if donate else {}),
    )(x2d, scale)

    return out2d.reshape(x.shape)


# ----------------------------------------------------------------------------
if __name__ == "__main__":
    key = jax.random.PRNGKey(0)
    kx, kmask = jax.random.split(key)

    B, C, H, W = 2, 4, 16, 16
    prob = 0.25
    x = jax.random.normal(kx, (B, C, H, W), dtype=jnp.float32)

    # --- training path (runs the Pallas kernel) ---
    out = dropsample(x, prob=prob, training=True, key=kmask)
    out = jax.block_until_ready(out)

    # pure-JAX reference with the same key -> same keep mask, same f32 scale math
    keep_ref = jax.random.uniform(kmask, (B,)) > prob
    scale_ref = keep_ref.astype(jnp.float32) / jnp.float32(1.0 - prob)
    ref = (x * scale_ref[:, None, None, None]).astype(x.dtype)

    assert out.shape == x.shape, out.shape
    assert bool(jnp.all(jnp.isfinite(out)))
    assert bool(jnp.allclose(out, ref, atol=1e-6, rtol=1e-6))

    # --- bf16 path exercises the dtype-aware sublane alignment ---
    xb = x.astype(jnp.bfloat16)
    outb = jax.block_until_ready(dropsample(xb, prob=prob, training=True, key=kmask))
    refb = (xb * scale_ref[:, None, None, None]).astype(jnp.bfloat16)
    assert bool(jnp.allclose(outb.astype(jnp.float32), refb.astype(jnp.float32),
                             atol=1e-2, rtol=1e-2))

    # --- eval path is identity (module returns x untouched) ---
    assert bool(jnp.array_equal(dropsample(x, prob=prob, training=False), x))

    # --- prob == 0 is identity even in training ---
    assert bool(jnp.array_equal(dropsample(x, prob=0.0, training=True, key=kmask), x))

    print("KERNEL_OK")
</pallas_src>

<mosaic_0001>
module attributes {stable_mosaic.version = 11 : i64} {
  func.func @kernel(%arg0: i32, %arg1: i32, %arg2: memref<2x1024xf32, #tpu.memory_space<vmem>>, %arg3: memref<2x1xf32, #tpu.memory_space<vmem>>, %arg4: memref<2x1024xf32, #tpu.memory_space<vmem>>) attributes {dimension_semantics = [#tpu.dimension_semantics<parallel>, #tpu.dimension_semantics<parallel>], iteration_bounds = array<i64: 1, 1>, scalar_prefetch = 0 : i64, scratch_operands = 0 : i64, tpu.core_type = #tpu.core_type<tc>, window_params = [{transform_indices = @transform_0, window_bounds = array<i64: 2, 1024>}, {pipeline_mode = #tpu.pipeline_mode<synchronous>, transform_indices = @transform_1, window_bounds = array<i64: 2, 1>}, {transform_indices = @transform_2, window_bounds = array<i64: 2, 1024>}]} {
    %c0 = arith.constant 0 : index
    %c0_0 = arith.constant 0 : index
    %0 = vector.load %arg3[%c0, %c0_0] : memref<2x1xf32, #tpu.memory_space<vmem>>, vector<2x1xf32>
    %c0_1 = arith.constant 0 : index
    %c0_2 = arith.constant 0 : index
    %1 = vector.load %arg2[%c0_1, %c0_2] : memref<2x1024xf32, #tpu.memory_space<vmem>>, vector<2x1024xf32>
    %2 = vector.broadcast %0 : vector<2x1xf32> to vector<2x1024xf32>
    %3 = arith.mulf %1, %2 : vector<2x1024xf32>
    %c0_3 = arith.constant 0 : index
    %c0_4 = arith.constant 0 : index
    %4 = vector.load %arg4[%c0_3, %c0_4] : memref<2x1024xf32, #tpu.memory_space<vmem>>, vector<2x1024xf32>
    tpu.vector_store %arg4[%c0_3, %c0_4], %3 {strides = array<i32>} : memref<2x1024xf32, #tpu.memory_space<vmem>>, vector<2x1024xf32>,
    return
  }
  func.func @transform_0(%arg0: i32, %arg1: i32) -> (i32, i32) {
    %c0_i32 = arith.constant 0 : i32
    return %arg0, %arg1 : i32, i32
  }
  func.func @transform_1(%arg0: i32, %arg1: i32) -> (i32, i32) {
    %c0_i32 = arith.constant 0 : i32
    %c0_i32_0 = arith.constant 0 : i32
    %c0_i32_1 = arith.constant 0 : i32
    return %c0_i32, %c0_i32_0 : i32, i32
  }
  func.func @transform_2(%arg0: i32, %arg1: i32) -> (i32, i32) {
    %c0_i32 = arith.constant 0 : i32
    return %arg0, %arg1 : i32, i32
  }
}

</mosaic_0001>

<llo_original>
// kernel: tpu_custom_call.1
$region0: #{tpu_custom_call.1}
  #allocation0 [shape = 'u32[]', space=smem, size = 0x4, offset = 0x4, fixed_abs, tag = 'smem constant byte address 0x4 - core index']
  #allocation1 [shape = 'u32[144,128]{1,0:T(1,128)}', space=vmem, size = 0x12000, scoped, tag = 'internal scratch']
  %s0 = inlined_call_operand.hbm [shape: f32[2,1024], index: 0, kind: input, shape index: {}]
  %s1 = inlined_call_operand.vmem [shape: f32[2,1], index: 1, kind: input, shape index: {}]
  %s2 = inlined_call_operand.hbm [shape: f32[2,1024], index: 2, kind: output, shape index: {}]
  %s3 = sld [smem:[#allocation0]]
  $region22: #{tpu_custom_call.1} parent=0
    _
  %s5 = ssub.s32 1, %s3
  %s6 = scalar_select 0, %s5, %s3
  $region1: #{tpu_custom_call.1} parent=0
    #allocation2 [shape = 'u8[8192]{0}', space=vmem, size = 0x2000, scoped, tag = 'input window, operand 0, single buffered']
    #allocation3 [shape = 's32[1]{0}', space=sflag, size = 0x4, scoped, tag = 'scoped memory for tpu_custom_call.1']
    #allocation4 [shape = 's32[1]{0}', space=sflag, size = 0x4, scoped, tag = 'scoped memory for tpu_custom_call.1']
    #allocation5 [shape = 'u8[8192]{0}', space=vmem, size = 0x2000, scoped, tag = 'output window, operand 0, single buffered']
    %7 = vsyncpa [#allocation3], 0
    %8 = vsyncpa [#allocation4], 0
    // Predicated region
    $region2: #{tpu_custom_call.1} parent=1 // pred_check
      _
    $region3: #{tpu_custom_call.1} parent=1 // pred_check_branch
      %10 = sbr.rel (0) target = $region5
    $region4: #{tpu_custom_call.1} parent=1 // pred_region
      %s12 = ssub.s32 256, 256
      %13 = vsyncadd [#allocation3], %s12
      %s15 = sshll.u32 [#allocation2], 4
      %s16 = int_to_ptr.vmem [resolvable:$true] %s15
      %18 = dma.hbm_to_vmem [thread:$0]  %s0, 256, %s16, [#allocation3]
    $region5: #{tpu_custom_call.1} parent=1 // pred_fallthru
      _
    // Predicated region
    $region6: #{tpu_custom_call.1} parent=1 // pred_check
      _
    $region7: #{tpu_custom_call.1} parent=1 // pred_check_branch
      %20 = sbr.rel (0) target = $region9
    $region8: #{tpu_custom_call.1} parent=1 // pred_region
      _
    $region9: #{tpu_custom_call.1} parent=1 // pred_fallthru
      _
    // Predicated region
    $region10: #{tpu_custom_call.1} parent=1 // pred_check
      _
    $region11: #{tpu_custom_call.1} parent=1 // pred_check_branch
      %22 = sbr.rel (0) target = $region13
    $region12: #{tpu_custom_call.1} parent=1 // pred_region
      %23 = dma.done [#allocation3], 256
    $region13: #{tpu_custom_call.1} parent=1 // pred_fallthru
      _
    %v24 = vld [vmem:[%s1] sm:$0x3]
    %v25 = vld [vmem:[#allocation2] sm:$0xff]
    %v26 = vld [vmem:[#allocation2 + $0x8] sm:$0xff]
    %28 = vset.pattern.permute.xlu0 0
    %29 = vperm.xlu0 %28, %v24
    %v30 = vpop.permute.xlu0 %29
    %v32 = vunpack.c.l.s4 269488144
    %v33 = vunpack.c.0.s8 %v32
    %v34 = vlaneseq
    %v35 = vshrl.u32 %v34, 7
    %v36 = vsub.s32 %v33, %v35
    %v37 = vrot.slane %v30, %v36
    %v39 = vmul.f32 %v25, %v37
    %v40 = vmul.f32 %v26, %v37
    %41 = vst [vmem:[#allocation5] sm:$0xff] %v39
    %42 = vst [vmem:[#allocation5 + $0x8] sm:$0xff] %v40
    // Predicated region
    $region14: #{tpu_custom_call.1} parent=1 // pred_check
      _
    $region15: #{tpu_custom_call.1} parent=1 // pred_check_branch
      %44 = sbr.rel (0) target = $region17
    $region16: #{tpu_custom_call.1} parent=1 // pred_region
      %s46 = ssub.s32 256, 256
      %47 = vsyncadd [#allocation4], %s46
      %s49 = sshll.u32 [#allocation5], 4
      %s50 = int_to_ptr.vmem [resolvable:$true] %s49
      %52 = dma.vmem_to_hbm [thread:$0]  %s50, 256, %s2, [#allocation4]
    $region17: #{tpu_custom_call.1} parent=1 // pred_fallthru
      _
    // Predicated region
    $region18: #{tpu_custom_call.1} parent=1 // pred_check
      _
    $region19: #{tpu_custom_call.1} parent=1 // pred_check_branch
      %54 = sbr.rel (0) target = $region21
    $region20: #{tpu_custom_call.1} parent=1 // pred_region
      %55 = dma.done [#allocation4], 256
    $region21: #{tpu_custom_call.1} parent=1 // pred_fallthru
      _
    %56 = vsyncpa [#allocation3], 1
    %57 = vsyncpa [#allocation4], 1

</llo_original>
